<compile_context>
chip_gen: v7x
topology: tpu7x:2x2x1
jax: 0.10.0
libtpu: 0.0.40
codegen_flags: <defaults>
</compile_context>

<pallas_src>
import jax
import jax.numpy as jnp
from jax import lax
from jax.experimental import pallas as pl
from jax.experimental.pallas import tpu as pltpu


def cnn_extractor_kernel(x_ref, w1_ref, b1_ref, w2_ref, b2_ref,
                         wfc_ref, bfc_ref, out_ref):
    """One batch tile per grid step; batch lives on the lane (last) axis.

    x_ref  : (C0*L0, TB)      input slab (feature-major rows, batch on lanes)
    w1_ref : (C1*L1, C0*L0)   conv1 expanded to a dense matrix (valid conv)
    b1_ref : (C1*L1, 1)       conv1 bias, repeated per output position
    w2_ref : (C2*L2, C1*L1)   conv2 expanded
    b2_ref : (C2*L2, 1)
    wfc_ref: (F, C2*L2)       torch Linear weight (channel-major flatten order)
    bfc_ref: (F, 1)
    out_ref: (F, TB)          lane-dense output (transposed back in wrapper)
    """
    x = x_ref[...]

    h1 = jnp.dot(w1_ref[...], x, preferred_element_type=jnp.float32)
    h1 = jnp.maximum(h1 + b1_ref[...], 0.0)                    # (C1*L1, TB)

    h2 = jnp.dot(w2_ref[...], h1, preferred_element_type=jnp.float32)
    h2 = jnp.maximum(h2 + b2_ref[...], 0.0)                    # (C2*L2, TB)

    y = jnp.dot(wfc_ref[...], h2, preferred_element_type=jnp.float32)
    out_ref[...] = jnp.maximum(y + bfc_ref[...], 0.0)          # (F, TB)


def _expand_conv_weight(w, l_in):
    """Expand a Conv1d weight (C_out, C_in, K) into the dense matrix of the
    valid conv (stride 1, dilation 1): shape (C_out*L_out, C_in*L_in).

    Row index  = c_out * L_out + t   (channel-major, == torch Flatten order)
    Col index  = c_in  * L_in  + s   (matches NCW input flattened per sample)
    Entry      = w[c_out, c_in, s - t] if 0 <= s - t < K else 0.
    """
    c_out, c_in, k = w.shape
    l_out = l_in - k + 1
    t = jnp.arange(l_out)[:, None]                 # (L_out, 1)
    s = jnp.arange(l_in)[None, :]                  # (1, L_in)
    d = s - t                                      # tap index per (t, s)
    valid = (d >= 0) & (d < k)
    taps = w[:, :, jnp.clip(d, 0, k - 1)]          # (C_out, C_in, L_out, L_in)
    taps = jnp.where(valid[None, None], taps, 0.0)
    return jnp.transpose(taps, (0, 2, 1, 3)).reshape(c_out * l_out, c_in * l_in)


def cnn_extractor(x, params, *, tb=128):
    """x: (B, C0, L0) float32.  params = (w1, b1, w2, b2, wfc, bfc) in PyTorch
    shapes: w1 (C1,C0,K), b1 (C1,), w2 (C2,C1,K), b2 (C2,), wfc (F, C2*L2),
    bfc (F,).  Returns (B, F)."""
    w1, b1, w2, b2, wfc, bfc = params
    B, C0, L0 = x.shape
    C1, _, K1 = w1.shape
    C2, _, K2 = w2.shape
    F = bfc.shape[0]
    L1 = L0 - K1 + 1
    L2 = L1 - K2 + 1
    assert wfc.shape == (F, C2 * L2)

    # ---- Parameter repack (trace-time glue, done once) ----
    w1e = _expand_conv_weight(w1.astype(jnp.float32), L0)           # (C1*L1, C0*L0)
    w2e = _expand_conv_weight(w2.astype(jnp.float32), L1)           # (C2*L2, C1*L1)
    b1e = jnp.repeat(b1.astype(jnp.float32), L1).reshape(C1 * L1, 1)
    b2e = jnp.repeat(b2.astype(jnp.float32), L2).reshape(C2 * L2, 1)
    wfc_f = wfc.astype(jnp.float32)                                  # (F, C2*L2)
    bfc_c = bfc.reshape(F, 1).astype(jnp.float32)

    # ---- Batch onto the lane axis: x_slab[c*L0 + l, b] = x[b, c, l] ----
    D0 = C0 * L0
    x_slab = x.reshape(B, D0).T.astype(jnp.float32)                  # (D0, B)
    n_tiles = pl.cdiv(B, tb)
    Bp = n_tiles * tb
    if Bp != B:
        x_slab = jnp.pad(x_slab, ((0, 0), (0, Bp - B)))

    out_fb = pl.pallas_call(
        cnn_extractor_kernel,
        out_shape=jax.ShapeDtypeStruct((F, Bp), jnp.float32),
        grid=(n_tiles,),
        in_specs=[
            pl.BlockSpec((D0, tb), lambda i: (0, i)),
            pl.BlockSpec((C1 * L1, D0), lambda i: (0, 0)),
            pl.BlockSpec((C1 * L1, 1), lambda i: (0, 0)),
            pl.BlockSpec((C2 * L2, C1 * L1), lambda i: (0, 0)),
            pl.BlockSpec((C2 * L2, 1), lambda i: (0, 0)),
            pl.BlockSpec((F, C2 * L2), lambda i: (0, 0)),
            pl.BlockSpec((F, 1), lambda i: (0, 0)),
        ],
        out_specs=pl.BlockSpec((F, tb), lambda i: (0, i)),
        compiler_params=pltpu.CompilerParams(
            dimension_semantics=("parallel",)),
    )(x_slab, w1e, b1e, w2e, b2e, wfc_f, bfc_c)

    # Lane-dense (F, Bp) -> (B, F) in the wrapper (pure layout plumbing).
    return out_fb[:, :B].T


def reference(x, w1, b1, w2, b2, wfc, bfc):
    """Pure-JAX reference mirroring the PyTorch forward (eval mode)."""
    dn = ("NCH", "OIH", "NCH")
    h1 = lax.conv_general_dilated(x, w1, (1,), "VALID", dimension_numbers=dn)
    h1 = jnp.maximum(h1 + b1[None, :, None], 0.0)
    h2 = lax.conv_general_dilated(h1, w2, (1,), "VALID", dimension_numbers=dn)
    h2 = jnp.maximum(h2 + b2[None, :, None], 0.0)
    flat = h2.reshape(h2.shape[0], -1)
    return jnp.maximum(flat @ wfc.T + bfc[None, :], 0.0)


if __name__ == "__main__":
    # Small, deterministic configuration (module shapes); batch chosen so the
    # batched kernel runs 2 parallel grid steps of TB=128 lanes each.
    B, C0, L0 = 256, 4, 16        # batch, input_channels, seq_len
    C1, C2 = 8, 4                 # units = [8, 4]
    K = 3                         # kernel_size
    F = 16                        # fc_units
    L1 = L0 - K + 1
    L2 = L1 - K + 1

    key = jax.random.PRNGKey(0)
    ks = jax.random.split(key, 7)
    x = jax.random.normal(ks[0], (B, C0, L0), jnp.float32)
    # Deterministic synthetic parameters (shapes follow nn.Conv1d / nn.Linear).
    w1 = jax.random.normal(ks[1], (C1, C0, K), jnp.float32) * 0.3
    b1 = jax.random.normal(ks[2], (C1,), jnp.float32) * 0.1
    w2 = jax.random.normal(ks[3], (C2, C1, K), jnp.float32) * 0.3
    b2 = jax.random.normal(ks[4], (C2,), jnp.float32) * 0.1
    wfc = jax.random.normal(ks[5], (F, C2 * L2), jnp.float32) * 0.1
    bfc = jax.random.normal(ks[6], (F,), jnp.float32) * 0.1

    out = cnn_extractor(x, (w1, b1, w2, b2, wfc, bfc))
    out = jax.block_until_ready(out)

    ref = reference(x, w1, b1, w2, b2, wfc, bfc)
    assert out.shape == (B, F), out.shape
    assert jnp.allclose(out, ref, atol=1e-4, rtol=1e-4), \
        f"max abs err {jnp.max(jnp.abs(out - ref))}"
    print("KERNEL_OK")
</pallas_src>

<mosaic_0001>
module attributes {stable_mosaic.version = 11 : i64} {
  func.func @cnn_extractor_kernel(%arg0: i32, %arg1: memref<64x128xf32, #tpu.memory_space<vmem>>, %arg2: memref<112x64xf32, #tpu.memory_space<vmem>>, %arg3: memref<112x1xf32, #tpu.memory_space<vmem>>, %arg4: memref<48x112xf32, #tpu.memory_space<vmem>>, %arg5: memref<48x1xf32, #tpu.memory_space<vmem>>, %arg6: memref<16x48xf32, #tpu.memory_space<vmem>>, %arg7: memref<16x1xf32, #tpu.memory_space<vmem>>, %arg8: memref<16x128xf32, #tpu.memory_space<vmem>>) attributes {dimension_semantics = [#tpu.dimension_semantics<parallel>], iteration_bounds = array<i64: 2>, scalar_prefetch = 0 : i64, scratch_operands = 0 : i64, tpu.core_type = #tpu.core_type<tc>, window_params = [{transform_indices = @transform_0, window_bounds = array<i64: 64, 128>}, {pipeline_mode = #tpu.pipeline_mode<synchronous>, transform_indices = @transform_1, window_bounds = array<i64: 112, 64>}, {pipeline_mode = #tpu.pipeline_mode<synchronous>, transform_indices = @transform_2, window_bounds = array<i64: 112, 1>}, {pipeline_mode = #tpu.pipeline_mode<synchronous>, transform_indices = @transform_3, window_bounds = array<i64: 48, 112>}, {pipeline_mode = #tpu.pipeline_mode<synchronous>, transform_indices = @transform_4, window_bounds = array<i64: 48, 1>}, {pipeline_mode = #tpu.pipeline_mode<synchronous>, transform_indices = @transform_5, window_bounds = array<i64: 16, 48>}, {pipeline_mode = #tpu.pipeline_mode<synchronous>, transform_indices = @transform_6, window_bounds = array<i64: 16, 1>}, {transform_indices = @transform_7, window_bounds = array<i64: 16, 128>}]} {
    %c0 = arith.constant 0 : index
    %c0_0 = arith.constant 0 : index
    %0 = vector.load %arg1[%c0, %c0_0] : memref<64x128xf32, #tpu.memory_space<vmem>>, vector<64x128xf32>
    %c0_1 = arith.constant 0 : index
    %c0_2 = arith.constant 0 : index
    %1 = vector.load %arg2[%c0_1, %c0_2] : memref<112x64xf32, #tpu.memory_space<vmem>>, vector<112x64xf32>
    %cst = arith.constant dense<0.000000e+00> : vector<112x128xf32>
    %2 = tpu.matmul %1, %0, %cst {dimension_numbers = #tpu.dot_dimension_numbers<[1], [0], [0], [1], [0, 0, 1, 1], [], []>} : vector<112x64xf32>, vector<64x128xf32>, vector<112x128xf32> -> vector<112x128xf32>
    %c0_3 = arith.constant 0 : index
    %c0_4 = arith.constant 0 : index
    %3 = vector.load %arg3[%c0_3, %c0_4] : memref<112x1xf32, #tpu.memory_space<vmem>>, vector<112x1xf32>
    %4 = vector.broadcast %3 : vector<112x1xf32> to vector<112x128xf32>
    %5 = arith.addf %2, %4 : vector<112x128xf32>
    %cst_5 = arith.constant 0.000000e+00 : f32
    %6 = vector.broadcast %cst_5 : f32 to vector<112x128xf32>
    %7 = arith.maximumf %5, %6 : vector<112x128xf32>
    %c0_6 = arith.constant 0 : index
    %c0_7 = arith.constant 0 : index
    %8 = vector.load %arg4[%c0_6, %c0_7] : memref<48x112xf32, #tpu.memory_space<vmem>>, vector<48x112xf32>
    %cst_8 = arith.constant dense<0.000000e+00> : vector<48x128xf32>
    %9 = tpu.matmul %8, %7, %cst_8 {dimension_numbers = #tpu.dot_dimension_numbers<[1], [0], [0], [1], [0, 0, 1, 1], [], []>} : vector<48x112xf32>, vector<112x128xf32>, vector<48x128xf32> -> vector<48x128xf32>
    %c0_9 = arith.constant 0 : index
    %c0_10 = arith.constant 0 : index
    %10 = vector.load %arg5[%c0_9, %c0_10] : memref<48x1xf32, #tpu.memory_space<vmem>>, vector<48x1xf32>
    %11 = vector.broadcast %10 : vector<48x1xf32> to vector<48x128xf32>
    %12 = arith.addf %9, %11 : vector<48x128xf32>
    %cst_11 = arith.constant 0.000000e+00 : f32
    %13 = vector.broadcast %cst_11 : f32 to vector<48x128xf32>
    %14 = arith.maximumf %12, %13 : vector<48x128xf32>
    %c0_12 = arith.constant 0 : index
    %c0_13 = arith.constant 0 : index
    %15 = vector.load %arg6[%c0_12, %c0_13] : memref<16x48xf32, #tpu.memory_space<vmem>>, vector<16x48xf32>
    %cst_14 = arith.constant dense<0.000000e+00> : vector<16x128xf32>
    %16 = tpu.matmul %15, %14, %cst_14 {dimension_numbers = #tpu.dot_dimension_numbers<[1], [0], [0], [1], [0, 0, 1, 1], [], []>} : vector<16x48xf32>, vector<48x128xf32>, vector<16x128xf32> -> vector<16x128xf32>
    %c0_15 = arith.constant 0 : index
    %c0_16 = arith.constant 0 : index
    %17 = vector.load %arg7[%c0_15, %c0_16] : memref<16x1xf32, #tpu.memory_space<vmem>>, vector<16x1xf32>
    %18 = vector.broadcast %17 : vector<16x1xf32> to vector<16x128xf32>
    %19 = arith.addf %16, %18 : vector<16x128xf32>
    %cst_17 = arith.constant 0.000000e+00 : f32
    %20 = vector.broadcast %cst_17 : f32 to vector<16x128xf32>
    %21 = arith.maximumf %19, %20 : vector<16x128xf32>
    %c0_18 = arith.constant 0 : index
    %c0_19 = arith.constant 0 : index
    %22 = vector.load %arg8[%c0_18, %c0_19] : memref<16x128xf32, #tpu.memory_space<vmem>>, vector<16x128xf32>
    tpu.vector_store %arg8[%c0_18, %c0_19], %21 {strides = array<i32>} : memref<16x128xf32, #tpu.memory_space<vmem>>, vector<16x128xf32>,
    return
  }
  func.func @transform_0(%arg0: i32) -> (i32, i32) {
    %c0_i32 = arith.constant 0 : i32
    %c0_i32_0 = arith.constant 0 : i32
    return %c0_i32, %arg0 : i32, i32
  }
  func.func @transform_1(%arg0: i32) -> (i32, i32) {
    %c0_i32 = arith.constant 0 : i32
    %c0_i32_0 = arith.constant 0 : i32
    %c0_i32_1 = arith.constant 0 : i32
    return %c0_i32, %c0_i32_0 : i32, i32
  }
  func.func @transform_2(%arg0: i32) -> (i32, i32) {
    %c0_i32 = arith.constant 0 : i32
    %c0_i32_0 = arith.constant 0 : i32
    %c0_i32_1 = arith.constant 0 : i32
    return %c0_i32, %c0_i32_0 : i32, i32
  }
  func.func @transform_3(%arg0: i32) -> (i32, i32) {
    %c0_i32 = arith.constant 0 : i32
    %c0_i32_0 = arith.constant 0 : i32
    %c0_i32_1 = arith.constant 0 : i32
    return %c0_i32, %c0_i32_0 : i32, i32
  }
  func.func @transform_4(%arg0: i32) -> (i32, i32) {
    %c0_i32 = arith.constant 0 : i32
    %c0_i32_0 = arith.constant 0 : i32
    %c0_i32_1 = arith.constant 0 : i32
    return %c0_i32, %c0_i32_0 : i32, i32
  }
  func.func @transform_5(%arg0: i32) -> (i32, i32) {
    %c0_i32 = arith.constant 0 : i32
    %c0_i32_0 = arith.constant 0 : i32
    %c0_i32_1 = arith.constant 0 : i32
    return %c0_i32, %c0_i32_0 : i32, i32
  }
  func.func @transform_6(%arg0: i32) -> (i32, i32) {
    %c0_i32 = arith.constant 0 : i32
    %c0_i32_0 = arith.constant 0 : i32
    %c0_i32_1 = arith.constant 0 : i32
    return %c0_i32, %c0_i32_0 : i32, i32
  }
  func.func @transform_7(%arg0: i32) -> (i32, i32) {
    %c0_i32 = arith.constant 0 : i32
    %c0_i32_0 = arith.constant 0 : i32
    return %c0_i32, %arg0 : i32, i32
  }
}

</mosaic_0001>

<llo_original>
// kernel: tpu_custom_call.1
$region0: #{tpu_custom_call.1}
  #allocation0 [shape = 'u32[]', space=smem, size = 0x4, offset = 0x4, fixed_abs, tag = 'smem constant byte address 0x4 - core index']
  #allocation1 [shape = 'u32[144,128]{1,0:T(1,128)}', space=vmem, size = 0x12000, scoped, tag = 'internal scratch']
  %s0 = inlined_call_operand.vmem [shape: f32[64,256], index: 0, kind: input, shape index: {}]
  %s1 = inlined_call_operand.vmem [shape: f32[112,64], index: 1, kind: input, shape index: {}]
  %s2 = inlined_call_operand.vmem [shape: f32[112,1], index: 2, kind: input, shape index: {}]
  %s3 = inlined_call_operand.vmem [shape: f32[48,112], index: 3, kind: input, shape index: {}]
  %s4 = inlined_call_operand.vmem [shape: f32[48,1], index: 4, kind: input, shape index: {}]
  %s5 = inlined_call_operand.vmem [shape: f32[16,48], index: 5, kind: input, shape index: {}]
  %s6 = inlined_call_operand.vmem [shape: f32[16,1], index: 6, kind: input, shape index: {}]
  %s7 = inlined_call_operand.hbm [shape: f32[16,256], index: 7, kind: output, shape index: {}]
  %s8 = sld [smem:[#allocation0]]
  $region99: #{tpu_custom_call.1} parent=0
    _
  %s10 = ssub.s32 1, %s8
  %s11 = scalar_select 0, %s10, %s8
  $region1: #{tpu_custom_call.1} parent=0
    #allocation2 [shape = 'u8[65536]{0}', space=vmem, size = 0x10000, scoped, tag = 'input window, operand 0']
    #allocation3 [shape = 'u8[16384]{0}', space=vmem, size = 0x4000, scoped, tag = 'output window, operand 0']
    #allocation4 [shape = 's32[2]{0}', space=sflag, size = 0x8, scoped, tag = 'scoped memory for tpu_custom_call.1']
    %12 = vsyncpa [#allocation4], 0
    %s13 = scalar_lea.sflag [#allocation4], 1
    %14 = vsyncpa %s13, 0
    loop: start=0, step=1, limit=4
    $region2: #{tpu_custom_call.1} parent=1 // loop_pre_header
      _
    $region3: #{tpu_custom_call.1} parent=1 // loop_header
      %s16 = sphi 0, %s20
      %p17 = scmp.ge.s32.totalorder %s16, 4
      %s26 = sphi 0, %s28
      %s29 = sphi 0, %s26
      %s30 = sphi 0, %s29
      %s46 = sphi 0, %s30
      %s50 = sphi 0, %s50
      %s52 = sphi 0, %s50
      %s53 = sphi 0, %s52
      %s67 = sphi 0, %s53
      %s71 = sphi 0, %s71
      %s73 = sphi 0, %s71
      %s74 = sphi 0, %s73
      %s88 = sphi 0, %s74
      %s92 = sphi 0, %s92
      %s94 = sphi 0, %s92
      %s95 = sphi 0, %s94
      %s109 = sphi 0, %s95
      %s113 = sphi 0, %s113
      %s115 = sphi 0, %s113
      %s116 = sphi 0, %s115
      %s130 = sphi 0, %s116
      %s134 = sphi 0, %s134
      %s136 = sphi 0, %s134
      %s137 = sphi 0, %s136
      %s151 = sphi 0, %s137
      %s155 = sphi 0, %s155
      %s157 = sphi 0, %s155
      %s158 = sphi 0, %s157
      %s172 = sphi 0, %s158
      %s178 = sphi 0, %s180
      %s181 = sphi 0, %s178
      %s182 = sphi 0, %s181
      %s198 = sphi 0, %s182
    $region4: #{tpu_custom_call.1} parent=1 // loop_header_branch
      %19 = sbr.rel (%p17) target = $region8
    $region5: #{tpu_custom_call.1} parent=1 // loop_body
      %s21 = ssub.s32 %s16, 1
      %s22 = ssub.s32 %s16, 2
      %s23 = sadd.s32 %s16, 1
      %s24 = ssub.s32 %s16, %s23
      %p25 = scmp.eq.s32.totalorder %s24, 0
      %s27 = sadd.s32 %s26, 1
      %s28 = scalar_select %p25, %s26, %s27
      %p31 = pneg %p25
      %p32 = scmp.eq.s32.totalorder %s16, 1
      %p33 = por %p31, %p32
      %p34 = scmp.ne.s32.totalorder %s26, %s29
      %p35 = scmp.eq.s32.totalorder %s16, 0
      %p36 = por %p34, %p35
      %p37 = scmp.ne.s32.totalorder %s26, %s29
      %p38 = scmp.eq.s32.totalorder %s21, 1
      %p39 = por %p37, %p38
      %p40 = scmp.ne.s32.totalorder %s29, %s30
      %p41 = scmp.eq.s32.totalorder %s21, 0
      %p42 = por %p40, %p41
      %p43 = scmp.ne.s32.totalorder %s29, %s30
      %p44 = scmp.eq.s32.totalorder %s22, 1
      %p45 = por %p43, %p44
      %p47 = scmp.ne.s32.totalorder %s30, %s46
      %p48 = scmp.eq.s32.totalorder %s22, 0
      %p49 = por %p47, %p48
      %s51 = sadd.s32 %s50, 1
      %p54 = scmp.eq.s32.totalorder %s16, 1
      %p55 = scmp.ne.s32.totalorder %s50, %s52
      %p56 = scmp.eq.s32.totalorder %s16, 0
      %p57 = por %p55, %p56
      %p58 = scmp.ne.s32.totalorder %s50, %s52
      %p59 = scmp.eq.s32.totalorder %s21, 1
      %p60 = por %p58, %p59
      %p61 = scmp.ne.s32.totalorder %s52, %s53
      %p62 = scmp.eq.s32.totalorder %s21, 0
      %p63 = por %p61, %p62
      %p64 = scmp.ne.s32.totalorder %s52, %s53
      %p65 = scmp.eq.s32.totalorder %s22, 1
      %p66 = por %p64, %p65
      %p68 = scmp.ne.s32.totalorder %s53, %s67
      %p69 = scmp.eq.s32.totalorder %s22, 0
      %p70 = por %p68, %p69
      %s72 = sadd.s32 %s71, 1
      %p75 = scmp.eq.s32.totalorder %s16, 1
      %p76 = scmp.ne.s32.totalorder %s71, %s73
      %p77 = scmp.eq.s32.totalorder %s16, 0
      %p78 = por %p76, %p77
      %p79 = scmp.ne.s32.totalorder %s71, %s73
      %p80 = scmp.eq.s32.totalorder %s21, 1
      %p81 = por %p79, %p80
      %p82 = scmp.ne.s32.totalorder %s73, %s74
      %p83 = scmp.eq.s32.totalorder %s21, 0
      %p84 = por %p82, %p83
      %p85 = scmp.ne.s32.totalorder %s73, %s74
      %p86 = scmp.eq.s32.totalorder %s22, 1
      %p87 = por %p85, %p86
      %p89 = scmp.ne.s32.totalorder %s74, %s88
      %p90 = scmp.eq.s32.totalorder %s22, 0
      %p91 = por %p89, %p90
      %s93 = sadd.s32 %s92, 1
      %p96 = scmp.eq.s32.totalorder %s16, 1
      %p97 = scmp.ne.s32.totalorder %s92, %s94
      %p98 = scmp.eq.s32.totalorder %s16, 0
      %p99 = por %p97, %p98
      %p100 = scmp.ne.s32.totalorder %s92, %s94
      %p101 = scmp.eq.s32.totalorder %s21, 1
      %p102 = por %p100, %p101
      %p103 = scmp.ne.s32.totalorder %s94, %s95
      %p104 = scmp.eq.s32.totalorder %s21, 0
      %p105 = por %p103, %p104
      %p106 = scmp.ne.s32.totalorder %s94, %s95
      %p107 = scmp.eq.s32.totalorder %s22, 1
      %p108 = por %p106, %p107
      %p110 = scmp.ne.s32.totalorder %s95, %s109
      %p111 = scmp.eq.s32.totalorder %s22, 0
      %p112 = por %p110, %p111
      %s114 = sadd.s32 %s113, 1
      %p117 = scmp.eq.s32.totalorder %s16, 1
      %p118 = scmp.ne.s32.totalorder %s113, %s115
      %p119 = scmp.eq.s32.totalorder %s16, 0
      %p120 = por %p118, %p119
      %p121 = scmp.ne.s32.totalorder %s113, %s115
      %p122 = scmp.eq.s32.totalorder %s21, 1
      %p123 = por %p121, %p122
      %p124 = scmp.ne.s32.totalorder %s115, %s116
      %p125 = scmp.eq.s32.totalorder %s21, 0
      %p126 = por %p124, %p125
      %p127 = scmp.ne.s32.totalorder %s115, %s116
      %p128 = scmp.eq.s32.totalorder %s22, 1
      %p129 = por %p127, %p128
      %p131 = scmp.ne.s32.totalorder %s116, %s130
      %p132 = scmp.eq.s32.totalorder %s22, 0
      %p133 = por %p131, %p132
      %s135 = sadd.s32 %s134, 1
      %p138 = scmp.eq.s32.totalorder %s16, 1
      %p139 = scmp.ne.s32.totalorder %s134, %s136
      %p140 = scmp.eq.s32.totalorder %s16, 0
      %p141 = por %p139, %p140
      %p142 = scmp.ne.s32.totalorder %s134, %s136
      %p143 = scmp.eq.s32.totalorder %s21, 1
      %p144 = por %p142, %p143
      %p145 = scmp.ne.s32.totalorder %s136, %s137
      %p146 = scmp.eq.s32.totalorder %s21, 0
      %p147 = por %p145, %p146
      %p148 = scmp.ne.s32.totalorder %s136, %s137
      %p149 = scmp.eq.s32.totalorder %s22, 1
      %p150 = por %p148, %p149
      %p152 = scmp.ne.s32.totalorder %s137, %s151
      %p153 = scmp.eq.s32.totalorder %s22, 0
      %p154 = por %p152, %p153
      %s156 = sadd.s32 %s155, 1
      %p159 = scmp.eq.s32.totalorder %s16, 1
      %p160 = scmp.ne.s32.totalorder %s155, %s157
      %p161 = scmp.eq.s32.totalorder %s16, 0
      %p162 = por %p160, %p161
      %p163 = scmp.ne.s32.totalorder %s155, %s157
      %p164 = scmp.eq.s32.totalorder %s21, 1
      %p165 = por %p163, %p164
      %p166 = scmp.ne.s32.totalorder %s157, %s158
      %p167 = scmp.eq.s32.totalorder %s21, 0
      %p168 = por %p166, %p167
      %p169 = scmp.ne.s32.totalorder %s157, %s158
      %p170 = scmp.eq.s32.totalorder %s22, 1
      %p171 = por %p169, %p170
      %p173 = scmp.ne.s32.totalorder %s158, %s172
      %p174 = scmp.eq.s32.totalorder %s22, 0
      %p175 = por %p173, %p174
      %s176 = ssub.s32 %s16, %s23
      %p177 = scmp.eq.s32.totalorder %s176, 0
      %s179 = sadd.s32 %s178, 1
      %s180 = scalar_select %p177, %s178, %s179
      %p183 = pneg %p177
      %p184 = scmp.eq.s32.totalorder %s16, 1
      %p185 = por %p183, %p184
      %p186 = scmp.ne.s32.totalorder %s178, %s181
      %p187 = scmp.eq.s32.totalorder %s16, 0
      %p188 = por %p186, %p187
      %p189 = scmp.ne.s32.totalorder %s178, %s181
      %p190 = scmp.eq.s32.totalorder %s21, 1
      %p191 = por %p189, %p190
      %p192 = scmp.ne.s32.totalorder %s181, %s182
      %p193 = scmp.eq.s32.totalorder %s21, 0
      %p194 = por %p192, %p193
      %p195 = scmp.ne.s32.totalorder %s181, %s182
      %p196 = scmp.eq.s32.totalorder %s22, 1
      %p197 = por %p195, %p196
      %p199 = scmp.ne.s32.totalorder %s182, %s198
      %p200 = scmp.eq.s32.totalorder %s22, 0
      %p201 = por %p199, %p200
      %p202 = scmp.le.s32.totalorder 1, %s16
      %p203 = scmp.lt.s32.totalorder %s16, 3
      %p204 = pnand %p202, %p203
      %p205 = pneg %p204
      // Predicated region
      $region9: #{tpu_custom_call.1} parent=5 // pred_check
        _
      $region10: #{tpu_custom_call.1} parent=5 // pred_check_branch
        %207 = sbr.rel (%p204) target = $region12
      $region11: #{tpu_custom_call.1} parent=5 // pred_region
        %s208 = ssub.s32 %s16, 1
        // Predicated region
        $region13: #{tpu_custom_call.1} parent=11 // pred_check
          %p209 = pneg %p63
        $region14: #{tpu_custom_call.1} parent=11 // pred_check_branch
          %211 = sbr.rel (%p209) target = $region16
        $region15: #{tpu_custom_call.1} parent=11 // pred_region
          _
        $region16: #{tpu_custom_call.1} parent=11 // pred_fallthru
          _
        // Predicated region
        $region17: #{tpu_custom_call.1} parent=11 // pred_check
          %p212 = pneg %p84
        $region18: #{tpu_custom_call.1} parent=11 // pred_check_branch
          %214 = sbr.rel (%p212) target = $region20
        $region19: #{tpu_custom_call.1} parent=11 // pred_region
          _
        $region20: #{tpu_custom_call.1} parent=11 // pred_fallthru
          _
        // Predicated region
        $region21: #{tpu_custom_call.1} parent=11 // pred_check
          %p215 = pneg %p105
        $region22: #{tpu_custom_call.1} parent=11 // pred_check_branch
          %217 = sbr.rel (%p215) target = $region24
        $region23: #{tpu_custom_call.1} parent=11 // pred_region
          _
        $region24: #{tpu_custom_call.1} parent=11 // pred_fallthru
          _
        // Predicated region
        $region25: #{tpu_custom_call.1} parent=11 // pred_check
          %p218 = pneg %p126
        $region26: #{tpu_custom_call.1} parent=11 // pred_check_branch
          %220 = sbr.rel (%p218) target = $region28
        $region27: #{tpu_custom_call.1} parent=11 // pred_region
          _
        $region28: #{tpu_custom_call.1} parent=11 // pred_fallthru
          _
        // Predicated region
        $region29: #{tpu_custom_call.1} parent=11 // pred_check
          %p221 = pneg %p147
        $region30: #{tpu_custom_call.1} parent=11 // pred_check_branch
          %223 = sbr.rel (%p221) target = $region32
        $region31: #{tpu_custom_call.1} parent=11 // pred_region
          _
        $region32: #{tpu_custom_call.1} parent=11 // pred_fallthru
          _
        // Predicated region
        $region33: #{tpu_custom_call.1} parent=11 // pred_check
          %p224 = pneg %p168
        $region34: #{tpu_custom_call.1} parent=11 // pred_check_branch
          %226 = sbr.rel (%p224) target = $region36
        $region35: #{tpu_custom_call.1} parent=11 // pred_region
          _
        $region36: #{tpu_custom_call.1} parent=11 // pred_fallthru
          _
      $region12: #{tpu_custom_call.1} parent=5 // pred_fallthru
        _
      %p227 = scmp.lt.s32.totalorder %s16, 2
      // Predicated region
      $region37: #{tpu_custom_call.1} parent=5 // pred_check
        %p228 = pneg %p227
      $region38: #{tpu_custom_call.1} parent=5 // pred_check_branch
        %230 = sbr.rel (%p228) target = $region40
      $region39: #{tpu_custom_call.1} parent=5 // pred_region
        // Predicated region
        $region41: #{tpu_custom_call.1} parent=39 // pred_check
          %p231 = pneg %p36
        $region42: #{tpu_custom_call.1} parent=39 // pred_check_branch
          %233 = sbr.rel (%p231) target = $region44
        $region43: #{tpu_custom_call.1} parent=39 // pred_region
          %s234 = sand.u32 %s26, 1
          %s235 = sand.u32 %s26, 1
          %s236 = smul.addr %s235, 64
          %s237 = scalar_lea.vmem [#allocation2], %s236
          %s238 = smul.addr %s16, 8
          %s239 = scalar_lea.vmem %s0, %s238
          // Predicated region
          $region45: #{tpu_custom_call.1} parent=43 // pred_check
            _
          $region46: #{tpu_custom_call.1} parent=43 // pred_check_branch
            %241 = sbr.rel (0) target = $region48
          $region47: #{tpu_custom_call.1} parent=43 // pred_region
            // Predicated region
            $region49: #{tpu_custom_call.1} parent=47 // pred_check
              _
            $region50: #{tpu_custom_call.1} parent=47 // pred_check_branch
              %243 = sbr.rel (0) target = $region52
            $region51: #{tpu_custom_call.1} parent=47 // pred_region
              // Predicated region
              $region64: #{tpu_custom_call.1} parent=51 // pred_check
                _
              $region65: #{tpu_custom_call.1} parent=51 // pred_check_branch
                %272 = sbr.rel (0) target = $region67
              $region66: #{tpu_custom_call.1} parent=51 // pred_region
                loop: start=0, step=1, limit=1
                $region68: #{tpu_custom_call.1} parent=66 // loop_pre_header
                  _
                $region69: #{tpu_custom_call.1} parent=66 // loop_header
                  %s274 = sphi 0, %s278
                  %p275 = scmp.ge.s32.totalorder %s274, 1
                  %s279 = sphi %s239, %s239
                  %s280 = sphi %s237, %s237
                $region70: #{tpu_custom_call.1} parent=66 // loop_header_branch
                  %277 = sbr.rel (%p275) target = $region74
                $region71: #{tpu_custom_call.1} parent=66 // loop_body
                  %v281 = vld [vmem:[%s279] sm:$0xff]
                  %282 = vst [vmem:[%s280] sm:$0xff] %v281
                  %v283 = vld [vmem:[%s279 + $0x10] sm:$0xff]
                  %284 = vst [vmem:[%s280 + $0x8] sm:$0xff] %v283
                  %v285 = vld [vmem:[%s279 + $0x20] sm:$0xff]
                  %286 = vst [vmem:[%s280 + $0x10] sm:$0xff] %v285
                  %v287 = vld [vmem:[%s279 + $0x30] sm:$0xff]
                  %288 = vst [vmem:[%s280 + $0x18] sm:$0xff] %v287
                  %v289 = vld [vmem:[%s279 + $0x40] sm:$0xff]
                  %290 = vst [vmem:[%s280 + $0x20] sm:$0xff] %v289
                  %v291 = vld [vmem:[%s279 + $0x50] sm:$0xff]
                  %292 = vst [vmem:[%s280 + $0x28] sm:$0xff] %v291
                  %v293 = vld [vmem:[%s279 + $0x60] sm:$0xff]
                  %294 = vst [vmem:[%s280 + $0x30] sm:$0xff] %v293
                  %v295 = vld [vmem:[%s279 + $0x70] sm:$0xff]
                  %296 = vst [vmem:[%s280 + $0x38] sm:$0xff] %v295
                $region72: #{tpu_custom_call.1} parent=66 // loop_footer
                  %s278 = sadd.s32 1, %s274
                $region73: #{tpu_custom_call.1} parent=66 // loop_footer_branch
                  %273 = sbr.rel target = $region69
                $region74: #{tpu_custom_call.1} parent=66 // loop_exit
                  _
              $region67: #{tpu_custom_call.1} parent=51 // pred_fallthru
                _
              // Predicated region
              $region75: #{tpu_custom_call.1} parent=51 // pred_check
                _
              $region76: #{tpu_custom_call.1} parent=51 // pred_check_branch
                %298 = sbr.rel target = $region78
              $region77: #{tpu_custom_call.1} parent=51 // pred_region
                _
              $region78: #{tpu_custom_call.1} parent=51 // pred_fallthru
                _
            $region52: #{tpu_custom_call.1} parent=47 // pred_fallthru
              _
            // Predicated region
            $region53: #{tpu_custom_call.1} parent=47 // pred_check
              _
            $region54: #{tpu_custom_call.1} parent=47 // pred_check_branch
              %245 = sbr.rel target = $region56
            $region55: #{tpu_custom_call.1} parent=47 // pred_region
              loop: start=0, step=1, limit=1
              $region57: #{tpu_custom_call.1} parent=55 // loop_pre_header
                _
              $region58: #{tpu_custom_call.1} parent=55 // loop_header
                %s248 = sphi 0, %s252
                %p249 = scmp.ge.s32.totalorder %s248, 1
                %s253 = sphi %s239, %s239
                %s254 = sphi %s237, %s237
              $region59: #{tpu_custom_call.1} parent=55 // loop_header_branch
                %251 = sbr.rel (%p249) target = $region63
              $region60: #{tpu_custom_call.1} parent=55 // loop_body
                %v255 = vld [vmem:[%s253] sm:$0xff]
                %256 = vst [vmem:[%s254] sm:$0xff] %v255
                %v257 = vld [vmem:[%s253 + $0x10] sm:$0xff]
                %258 = vst [vmem:[%s254 + $0x8] sm:$0xff] %v257
                %v259 = vld [vmem:[%s253 + $0x20] sm:$0xff]
                %260 = vst [vmem:[%s254 + $0x10] sm:$0xff] %v259
                %v261 = vld [vmem:[%s253 + $0x30] sm:$0xff]
                %262 = vst [vmem:[%s254 + $0x18] sm:$0xff] %v261
                %v263 = vld [vmem:[%s253 + $0x40] sm:$0xff]
                %264 = vst [vmem:[%s254 + $0x20] sm:$0xff] %v263
                %v265 = vld [vmem:[%s253 + $0x50] sm:$0xff]
                %266 = vst [vmem:[%s254 + $0x28] sm:$0xff] %v265
                %v267 = vld [vmem:[%s253 + $0x60] sm:$0xff]
                %268 = vst [vmem:[%s254 + $0x30] sm:$0xff] %v267
                %v269 = vld [vmem:[%s253 + $0x70] sm:$0xff]
                %270 = vst [vmem:[%s254 + $0x38] sm:$0xff] %v269
              $region61: #{tpu_custom_call.1} parent=55 // loop_footer
                %s252 = sadd.s32 1, %s248
              $region62: #{tpu_custom_call.1} parent=55 // loop_footer_branch
                %247 = sbr.rel target = $region58
              $region63: #{tpu_custom_call.1} parent=55 // loop_exit
                _
            $region56: #{tpu_custom_call.1} parent=47 // pred_fallthru
              _
          $region48: #{tpu_custom_call.1} parent=43 // pred_fallthru
            _
          %299 = vnop
        $region44: #{tpu_custom_call.1} parent=39 // pred_fallthru
          _
      $region40: #{tpu_custom_call.1} parent=5 // pred_fallthru
        _
      %p300 = scmp.le.s32.totalorder 1, %s16
      %p301 = scmp.lt.s32.totalorder %s16, 3
      %p302 = pnand %p300, %p301
      %p303 = pneg %p302
      // Predicated region
      $region79: #{tpu_custom_call.1} parent=5 // pred_check
        _
      $region80: #{tpu_custom_call.1} parent=5 // pred_check_branch
        %305 = sbr.rel (%p302) target = $region82
      $region81: #{tpu_custom_call.1} parent=5 // pred_region
        %s306 = ssub.s32 %s16, 1
        %s307 = sand.u32 %s29, 1
        %s308 = sand.u32 %s29, 1
        %s309 = smul.addr %s308, 64
        %s310 = scalar_lea.vmem [#allocation2], %s309
        // Predicated region
        $region83: #{tpu_custom_call.1} parent=81 // pred_check
          %p311 = pneg %p42
        $region84: #{tpu_custom_call.1} parent=81 // pred_check_branch
          %313 = sbr.rel (%p311) target = $region86
        $region85: #{tpu_custom_call.1} parent=81 // pred_region
          _
        $region86: #{tpu_custom_call.1} parent=81 // pred_fallthru
          _
        %s314 = sand.u32 %s29, 1
        %s315 = sand.u32 %s29, 1
        %s316 = smul.addr %s315, 64
        %s317 = scalar_lea.vmem [#allocation2], %s316
        %p318 = pneg %p42
        %p319 = pneg %p39
        %p320 = pneg %p63
        %p321 = pneg %p60
        %p322 = pneg %p84
        %p323 = pneg %p81
        %p324 = pneg %p105
        %p325 = pneg %p102
        %p326 = pneg %p126
        %p327 = pneg %p123
        %p328 = pneg %p147
        %p329 = pneg %p144
        %p330 = pneg %p168
        %p331 = pneg %p165
        %p332 = pneg %p194
        %p333 = pneg %p191
        %s334 = sand.u32 %s181, 1
        %s335 = scalar_lea.sflag [#allocation4], %s334
        %s336 = sand.u32 %s181, 1
        %s337 = smul.addr %s336, 16
        %s338 = scalar_lea.vmem [#allocation3], %s337
        %v339 = vld [vmem:[%s310] sm:$0xff]
        %v340 = vld [vmem:[%s310 + $0x8] sm:$0xff]
        %v341 = vld [vmem:[%s310 + $0x10] sm:$0xff]
        %v342 = vld [vmem:[%s310 + $0x18] sm:$0xff]
        %v343 = vld [vmem:[%s310 + $0x20] sm:$0xff]
        %v344 = vld [vmem:[%s310 + $0x28] sm:$0xff]
        %v345 = vld [vmem:[%s310 + $0x30] sm:$0xff]
        %v346 = vld [vmem:[%s310 + $0x38] sm:$0xff]
        %v347 = vld [vmem:[%s1] sm:$0xff]
        %v348 = vld [vmem:[%s1 + $0x8] sm:$0xff]
        %v349 = vld [vmem:[%s1 + $0x10] sm:$0xff]
        %v350 = vld [vmem:[%s1 + $0x18] sm:$0xff]
        %v351 = vld [vmem:[%s1 + $0x20] sm:$0xff]
        %v352 = vld [vmem:[%s1 + $0x28] sm:$0xff]
        %v353 = vld [vmem:[%s1 + $0x30] sm:$0xff]
        %v354 = vld [vmem:[%s1 + $0x38] sm:$0xff]
        %v355 = vld [vmem:[%s1 + $0x40] sm:$0xff]
        %v356 = vld [vmem:[%s1 + $0x48] sm:$0xff]
        %v357 = vld [vmem:[%s1 + $0x50] sm:$0xff]
        %v358 = vld [vmem:[%s1 + $0x58] sm:$0xff]
        %v359 = vld [vmem:[%s1 + $0x60] sm:$0xff]
        %v360 = vld [vmem:[%s1 + $0x68] sm:$0xff]
        %v361 = vld [vmem:[%s2] sm:$0xff]
        %v362 = vld [vmem:[%s2 + $0x8] sm:$0xff]
        %v363 = vld [vmem:[%s2 + $0x10] sm:$0xff]
        %v364 = vld [vmem:[%s2 + $0x18] sm:$0xff]
        %v365 = vld [vmem:[%s2 + $0x20] sm:$0xff]
        %v366 = vld [vmem:[%s2 + $0x28] sm:$0xff]
        %v367 = vld [vmem:[%s2 + $0x30] sm:$0xff]
        %v368 = vld [vmem:[%s2 + $0x38] sm:$0xff]
        %v369 = vld [vmem:[%s2 + $0x40] sm:$0xff]
        %v370 = vld [vmem:[%s2 + $0x48] sm:$0xff]
        %v371 = vld [vmem:[%s2 + $0x50] sm:$0xff]
        %v372 = vld [vmem:[%s2 + $0x58] sm:$0xff]
        %v373 = vld [vmem:[%s2 + $0x60] sm:$0xff]
        %v374 = vld [vmem:[%s2 + $0x68] sm:$0xff]
        %376 = vset.pattern.permute.xlu0 0
        %377 = vperm.xlu0 %376, %v361
        %v378 = vpop.permute.xlu0 %377
        %381 = vset.pattern.permute.xlu0 0
        %382 = vperm.xlu0 %381, %v362
        %v383 = vpop.permute.xlu0 %382
        %386 = vset.pattern.permute.xlu0 0
        %387 = vperm.xlu0 %386, %v363
        %v388 = vpop.permute.xlu0 %387
        %391 = vset.pattern.permute.xlu0 0
        %392 = vperm.xlu0 %391, %v364
        %v393 = vpop.permute.xlu0 %392
        %396 = vset.pattern.permute.xlu0 0
        %397 = vperm.xlu0 %396, %v365
        %v398 = vpop.permute.xlu0 %397
        %401 = vset.pattern.permute.xlu0 0
        %402 = vperm.xlu0 %401, %v366
        %v403 = vpop.permute.xlu0 %402
        %406 = vset.pattern.permute.xlu0 0
        %407 = vperm.xlu0 %406, %v367
        %v408 = vpop.permute.xlu0 %407
        %411 = vset.pattern.permute.xlu0 0
        %412 = vperm.xlu0 %411, %v368
        %v413 = vpop.permute.xlu0 %412
        %416 = vset.pattern.permute.xlu0 0
        %417 = vperm.xlu0 %416, %v369
        %v418 = vpop.permute.xlu0 %417
        %421 = vset.pattern.permute.xlu0 0
        %422 = vperm.xlu0 %421, %v370
        %v423 = vpop.permute.xlu0 %422
        %426 = vset.pattern.permute.xlu0 0
        %427 = vperm.xlu0 %426, %v371
        %v428 = vpop.permute.xlu0 %427
        %431 = vset.pattern.permute.xlu0 0
        %432 = vperm.xlu0 %431, %v372
        %v433 = vpop.permute.xlu0 %432
        %436 = vset.pattern.permute.xlu0 0
        %437 = vperm.xlu0 %436, %v373
        %v438 = vpop.permute.xlu0 %437
        %441 = vset.pattern.permute.xlu0 0
        %442 = vperm.xlu0 %441, %v374
        %v443 = vpop.permute.xlu0 %442
        %vm445 = vcmask 523264
        %v447 = vsel %vm445, %v347, 0
        %v450 = vsel %vm445, %v348, 0
        %v453 = vsel %vm445, %v349, 0
        %v456 = vsel %vm445, %v350, 0
        %v459 = vsel %vm445, %v351, 0
        %v462 = vsel %vm445, %v352, 0
        %v465 = vsel %vm445, %v353, 0
        %v468 = vsel %vm445, %v354, 0
        %v471 = vsel %vm445, %v355, 0
        %v474 = vsel %vm445, %v356, 0
        %v477 = vsel %vm445, %v357, 0
        %v480 = vsel %vm445, %v358, 0
        %v483 = vsel %vm445, %v359, 0
        %v486 = vsel %vm445, %v360, 0
        %488 = vmatprep.subr.mxu0 0.0
        %489 = vmatpush1.msra.mxu0 %v339
        %490 = vmatprep.subr.mxu0 0.0
        %491 = vmatpush1.msra.mxu0 %v340
        %492 = vmatprep.subr.mxu0 0.0
        %493 = vmatpush1.msra.mxu0 %v341
        %494 = vmatprep.subr.mxu0 0.0
        %495 = vmatpush1.msra.mxu0 %v342
        %496 = vmatprep.subr.mxu0 0.0
        %497 = vmatpush1.msra.mxu0 %v343
        %498 = vmatprep.subr.mxu0 0.0
        %499 = vmatpush1.msra.mxu0 %v344
        %500 = vmatprep.subr.mxu0 0.0
        %501 = vmatpush1.msra.mxu0 %v345
        %502 = vmatprep.subr.mxu0 0.0
        %503 = vmatpush1.msra.mxu0 %v346
        %504 = vmatprep.subr.mxu0 0.0
        %505 = vmatpush1.msra.mxu0 0.0
        %506 = vmatprep.subr.mxu0 0.0
        %507 = vmatpush1.msra.mxu0 0.0
        %508 = vmatprep.subr.mxu0 0.0
        %509 = vmatpush1.msra.mxu0 0.0
        %510 = vmatprep.subr.mxu0 0.0
        %511 = vmatpush1.msra.mxu0 0.0
        %512 = vmatprep.subr.mxu0 0.0
        %513 = vmatpush1.msra.mxu0 0.0
        %514 = vmatprep.subr.mxu0 0.0
        %515 = vmatpush1.msra.mxu0 0.0
        %516 = vmatprep.subr.mxu0 0.0
        %517 = vmatpush1.msra.mxu0 0.0
        %518 = vmatprep.subr.mxu0 0.0
        %519 = vmatpush1.msra.mxu0 0.0
        %520 = vmatprep.subr.mxu0 0.0
        %521 = vmatpush1.msra.mxu0 0.0
        %522 = vmatprep.subr.mxu0 0.0
        %523 = vmatpush1.msra.mxu0 0.0
        %524 = vmatprep.subr.mxu0 0.0
        %525 = vmatpush1.msra.mxu0 0.0
        %526 = vmatprep.subr.mxu0 0.0
        %527 = vmatpush1.msra.mxu0 0.0
        %528 = vmatprep.subr.mxu0 0.0
        %529 = vmatpush1.msra.mxu0 0.0
        %530 = vmatprep.subr.mxu0 0.0
        %531 = vmatpush1.msra.mxu0 0.0
        %532 = vmatprep.subr.mxu0 0.0
        %533 = vmatpush1.msra.mxu0 0.0
        %534 = vmatprep.subr.mxu0 0.0
        %535 = vmatpush1.msra.mxu0 0.0
        %536 = vmatprep.subr.mxu0 0.0
        %537 = vmatpush1.msra.mxu0 0.0
        %538 = vmatprep.subr.mxu0 0.0
        %539 = vmatpush1.msra.mxu0 0.0
        %540 = vmatprep.subr.mxu0 0.0
        %541 = vmatpush1.msra.mxu0 0.0
        %542 = vmatprep.subr.mxu0 0.0
        %543 = vmatpush1.msra.mxu0 0.0
        %544 = vmatprep.subr.mxu0 0.0
        %545 = vmatpush1.msra.mxu0 0.0
        %546 = vmatprep.subr.mxu0 0.0
        %547 = vmatpush1.msra.mxu0 0.0
        %548 = vmatprep.subr.mxu0 0.0
        %549 = vmatpush1.msra.mxu0 0.0
        %550 = vmatprep.subr.mxu0 0.0
        %551 = vmatpush1.msra.mxu0 0.0
        %552 = vmatprep.mubr.f32.mxu0 0.0
        %553 = vmatmul.mubr.f32.gmra.mrb[0].mxu0 %v447
        %v554 = vpop.f32.mrb[0].mxu0
        %v555 = vadd.f32 %v378, %v554
        %v556 = vpop.f32.mrb[0].mxu0
        %557 = vmatprep.mubr.f32.mxu0 0.0
        %558 = vmatmul.mubr.f32.gmra.mrb[0].mxu0 %v450
        %v559 = vpop.f32.mrb[0].mxu0
        %v560 = vadd.f32 %v383, %v559
        %v561 = vpop.f32.mrb[0].mxu0
        %562 = vmatprep.mubr.f32.mxu0 0.0
        %563 = vmatmul.mubr.f32.gmra.mrb[0].mxu0 %v453
        %v564 = vpop.f32.mrb[0].mxu0
        %v565 = vadd.f32 %v388, %v564
        %v566 = vpop.f32.mrb[0].mxu0
        %567 = vmatprep.mubr.f32.mxu0 0.0
        %568 = vmatmul.mubr.f32.gmra.mrb[0].mxu0 %v456
        %v569 = vpop.f32.mrb[0].mxu0
        %v570 = vadd.f32 %v393, %v569
        %v571 = vpop.f32.mrb[0].mxu0
        %572 = vmatprep.mubr.f32.mxu0 0.0
        %573 = vmatmul.mubr.f32.gmra.mrb[0].mxu0 %v459
        %v574 = vpop.f32.mrb[0].mxu0
        %v575 = vadd.f32 %v398, %v574
        %v576 = vpop.f32.mrb[0].mxu0
        %577 = vmatprep.mubr.f32.mxu0 0.0
        %578 = vmatmul.mubr.f32.gmra.mrb[0].mxu0 %v462
        %v579 = vpop.f32.mrb[0].mxu0
        %v580 = vadd.f32 %v403, %v579
        %v581 = vpop.f32.mrb[0].mxu0
        %582 = vmatprep.mubr.f32.mxu0 0.0
        %583 = vmatmul.mubr.f32.gmra.mrb[0].mxu0 %v465
        %v584 = vpop.f32.mrb[0].mxu0
        %v585 = vadd.f32 %v408, %v584
        %v586 = vpop.f32.mrb[0].mxu0
        %587 = vmatprep.mubr.f32.mxu0 0.0
        %588 = vmatmul.mubr.f32.gmra.mrb[0].mxu0 %v468
        %v589 = vpop.f32.mrb[0].mxu0
        %v590 = vadd.f32 %v413, %v589
        %v591 = vpop.f32.mrb[0].mxu0
        %592 = vmatprep.mubr.f32.mxu0 0.0
        %593 = vmatmul.mubr.f32.gmra.mrb[0].mxu0 %v471
        %v594 = vpop.f32.mrb[0].mxu0
        %v595 = vadd.f32 %v418, %v594
        %v596 = vpop.f32.mrb[0].mxu0
        %597 = vmatprep.mubr.f32.mxu0 0.0
        %598 = vmatmul.mubr.f32.gmra.mrb[0].mxu0 %v474
        %v599 = vpop.f32.mrb[0].mxu0
        %v600 = vadd.f32 %v423, %v599
        %v601 = vpop.f32.mrb[0].mxu0
        %602 = vmatprep.mubr.f32.mxu0 0.0
        %603 = vmatmul.mubr.f32.gmra.mrb[0].mxu0 %v477
        %v604 = vpop.f32.mrb[0].mxu0
        %v605 = vadd.f32 %v428, %v604
        %v606 = vpop.f32.mrb[0].mxu0
        %607 = vmatprep.mubr.f32.mxu0 0.0
        %608 = vmatmul.mubr.f32.gmra.mrb[0].mxu0 %v480
        %v609 = vpop.f32.mrb[0].mxu0
        %v610 = vadd.f32 %v433, %v609
        %v611 = vpop.f32.mrb[0].mxu0
        %612 = vmatprep.mubr.f32.mxu0 0.0
        %613 = vmatmul.mubr.f32.gmra.mrb[0].mxu0 %v483
        %v614 = vpop.f32.mrb[0].mxu0
        %v615 = vadd.f32 %v438, %v614
        %v616 = vpop.f32.mrb[0].mxu0
        %617 = vmatprep.mubr.f32.mxu0 0.0
        %618 = vmatmul.mubr.f32.gmra.mrb[0].mxu0 %v486
        %v619 = vpop.f32.mrb[0].mxu0
        %v620 = vadd.f32 %v443, %v619
        %v621 = vpop.f32.mrb[0].mxu0
        %622 = vdwg.mxu0
        %v623 = vmax.f32 %v555, 0.0
        %v624 = vmax.f32 %v560, 0.0
        %v625 = vmax.f32 %v565, 0.0
        %v626 = vmax.f32 %v570, 0.0
        %v627 = vmax.f32 %v575, 0.0
        %v628 = vmax.f32 %v580, 0.0
        %v629 = vmax.f32 %v585, 0.0
        %v630 = vmax.f32 %v590, 0.0
        %v631 = vmax.f32 %v595, 0.0
        %v632 = vmax.f32 %v600, 0.0
        %v633 = vmax.f32 %v605, 0.0
        %v634 = vmax.f32 %v610, 0.0
        %v635 = vmax.f32 %v615, 0.0
        %v636 = vmax.f32 %v620, 0.0
        %v637 = vld [vmem:[%s3] sm:$0xff]
        %v638 = vld [vmem:[%s3 + $0x8] sm:$0xff]
        %v639 = vld [vmem:[%s3 + $0x10] sm:$0xff]
        %v640 = vld [vmem:[%s3 + $0x18] sm:$0xff]
        %v641 = vld [vmem:[%s3 + $0x20] sm:$0xff]
        %v642 = vld [vmem:[%s3 + $0x28] sm:$0xff]
        %v643 = vld [vmem:[%s4] sm:$0xff]
        %v644 = vld [vmem:[%s4 + $0x8] sm:$0xff]
        %v645 = vld [vmem:[%s4 + $0x10] sm:$0xff]
        %v646 = vld [vmem:[%s4 + $0x18] sm:$0xff]
        %v647 = vld [vmem:[%s4 + $0x20] sm:$0xff]
        %v648 = vld [vmem:[%s4 + $0x28] sm:$0xff]
        %650 = vset.pattern.permute.xlu0 0
        %651 = vperm.xlu0 %650, %v643
        %v652 = vpop.permute.xlu0 %651
        %655 = vset.pattern.permute.xlu0 0
        %656 = vperm.xlu0 %655, %v644
        %v657 = vpop.permute.xlu0 %656
        %660 = vset.pattern.permute.xlu0 0
        %661 = vperm.xlu0 %660, %v645
        %v662 = vpop.permute.xlu0 %661
        %665 = vset.pattern.permute.xlu0 0
        %666 = vperm.xlu0 %665, %v646
        %v667 = vpop.permute.xlu0 %666
        %670 = vset.pattern.permute.xlu0 0
        %671 = vperm.xlu0 %670, %v647
        %v672 = vpop.permute.xlu0 %671
        %675 = vset.pattern.permute.xlu0 0
        %676 = vperm.xlu0 %675, %v648
        %v677 = vpop.permute.xlu0 %676
        %vm679 = vcmask 916480
        %v681 = vsel %vm679, %v637, 0
        %v684 = vsel %vm679, %v638, 0
        %v687 = vsel %vm679, %v639, 0
        %v690 = vsel %vm679, %v640, 0
        %v693 = vsel %vm679, %v641, 0
        %v696 = vsel %vm679, %v642, 0
        %698 = vmatprep.subr.mxu0 0.0
        %699 = vmatpush1.msra.mxu0 %v623
        %700 = vmatprep.subr.mxu0 0.0
        %701 = vmatpush1.msra.mxu0 %v624
        %702 = vmatprep.subr.mxu0 0.0
        %703 = vmatpush1.msra.mxu0 %v625
        %704 = vmatprep.subr.mxu0 0.0
        %705 = vmatpush1.msra.mxu0 %v626
        %706 = vmatprep.subr.mxu0 0.0
        %707 = vmatpush1.msra.mxu0 %v627
        %708 = vmatprep.subr.mxu0 0.0
        %709 = vmatpush1.msra.mxu0 %v628
        %710 = vmatprep.subr.mxu0 0.0
        %711 = vmatpush1.msra.mxu0 %v629
        %712 = vmatprep.subr.mxu0 0.0
        %713 = vmatpush1.msra.mxu0 %v630
        %714 = vmatprep.subr.mxu0 0.0
        %715 = vmatpush1.msra.mxu0 %v631
        %716 = vmatprep.subr.mxu0 0.0
        %717 = vmatpush1.msra.mxu0 %v632
        %718 = vmatprep.subr.mxu0 0.0
        %719 = vmatpush1.msra.mxu0 %v633
        %720 = vmatprep.subr.mxu0 0.0
        %721 = vmatpush1.msra.mxu0 %v634
        %722 = vmatprep.subr.mxu0 0.0
        %723 = vmatpush1.msra.mxu0 %v635
        %724 = vmatprep.subr.mxu0 0.0
        %725 = vmatpush1.msra.mxu0 %v636
        %726 = vmatprep.subr.mxu0 0.0
        %727 = vmatpush1.msra.mxu0 0.0
        %728 = vmatprep.subr.mxu0 0.0
        %729 = vmatpush1.msra.mxu0 0.0
        %730 = vmatprep.subr.mxu0 0.0
        %731 = vmatpush1.msra.mxu0 0.0
        %732 = vmatprep.subr.mxu0 0.0
        %733 = vmatpush1.msra.mxu0 0.0
        %734 = vmatprep.subr.mxu0 0.0
        %735 = vmatpush1.msra.mxu0 0.0
        %736 = vmatprep.subr.mxu0 0.0
        %737 = vmatpush1.msra.mxu0 0.0
        %738 = vmatprep.subr.mxu0 0.0
        %739 = vmatpush1.msra.mxu0 0.0
        %740 = vmatprep.subr.mxu0 0.0
        %741 = vmatpush1.msra.mxu0 0.0
        %742 = vmatprep.subr.mxu0 0.0
        %743 = vmatpush1.msra.mxu0 0.0
        %744 = vmatprep.subr.mxu0 0.0
        %745 = vmatpush1.msra.mxu0 0.0
        %746 = vmatprep.subr.mxu0 0.0
        %747 = vmatpush1.msra.mxu0 0.0
        %748 = vmatprep.subr.mxu0 0.0
        %749 = vmatpush1.msra.mxu0 0.0
        %750 = vmatprep.subr.mxu0 0.0
        %751 = vmatpush1.msra.mxu0 0.0
        %752 = vmatprep.subr.mxu0 0.0
        %753 = vmatpush1.msra.mxu0 0.0
        %754 = vmatprep.subr.mxu0 0.0
        %755 = vmatpush1.msra.mxu0 0.0
        %756 = vmatprep.subr.mxu0 0.0
        %757 = vmatpush1.msra.mxu0 0.0
        %758 = vmatprep.subr.mxu0 0.0
        %759 = vmatpush1.msra.mxu0 0.0
        %760 = vmatprep.subr.mxu0 0.0
        %761 = vmatpush1.msra.mxu0 0.0
        %762 = vmatprep.mubr.f32.mxu0 0.0
        %763 = vmatmul.mubr.f32.gmra.mrb[0].mxu0 %v681
        %v764 = vpop.f32.mrb[0].mxu0
        %v765 = vadd.f32 %v652, %v764
        %v766 = vpop.f32.mrb[0].mxu0
        %767 = vmatprep.mubr.f32.mxu0 0.0
        %768 = vmatmul.mubr.f32.gmra.mrb[0].mxu0 %v684
        %v769 = vpop.f32.mrb[0].mxu0
        %v770 = vadd.f32 %v657, %v769
        %v771 = vpop.f32.mrb[0].mxu0
        %772 = vmatprep.mubr.f32.mxu0 0.0
        %773 = vmatmul.mubr.f32.gmra.mrb[0].mxu0 %v687
        %v774 = vpop.f32.mrb[0].mxu0
        %v775 = vadd.f32 %v662, %v774
        %v776 = vpop.f32.mrb[0].mxu0
        %777 = vmatprep.mubr.f32.mxu0 0.0
        %778 = vmatmul.mubr.f32.gmra.mrb[0].mxu0 %v690
        %v779 = vpop.f32.mrb[0].mxu0
        %v780 = vadd.f32 %v667, %v779
        %v781 = vpop.f32.mrb[0].mxu0
        %782 = vmatprep.mubr.f32.mxu0 0.0
        %783 = vmatmul.mubr.f32.gmra.mrb[0].mxu0 %v693
        %v784 = vpop.f32.mrb[0].mxu0
        %v785 = vadd.f32 %v672, %v784
        %v786 = vpop.f32.mrb[0].mxu0
        %787 = vmatprep.mubr.f32.mxu0 0.0
        %788 = vmatmul.mubr.f32.gmra.mrb[0].mxu0 %v696
        %v789 = vpop.f32.mrb[0].mxu0
        %v790 = vadd.f32 %v677, %v789
        %v791 = vpop.f32.mrb[0].mxu0
        %792 = vdwg.mxu0
        %v793 = vmax.f32 %v765, 0.0
        %v794 = vmax.f32 %v770, 0.0
        %v795 = vmax.f32 %v775, 0.0
        %v796 = vmax.f32 %v780, 0.0
        %v797 = vmax.f32 %v785, 0.0
        %v798 = vmax.f32 %v790, 0.0
        %v799 = vld [vmem:[%s5] sm:$0xff]
        %v800 = vld [vmem:[%s5 + $0x8] sm:$0xff]
        %v801 = vld [vmem:[%s6] sm:$0xff]
        %v802 = vld [vmem:[%s6 + $0x8] sm:$0xff]
        %804 = vset.pattern.permute.xlu0 0
        %805 = vperm.xlu0 %804, %v801
        %v806 = vpop.permute.xlu0 %805
        %809 = vset.pattern.permute.xlu0 0
        %810 = vperm.xlu0 %809, %v802
        %v811 = vpop.permute.xlu0 %810
        %vm813 = vcmask 392192
        %v815 = vsel %vm813, %v799, 0
        %v818 = vsel %vm813, %v800, 0
        %820 = vmatprep.subr.mxu0 0.0
        %821 = vmatpush1.msra.mxu0 %v793
        %822 = vmatprep.subr.mxu0 0.0
        %823 = vmatpush1.msra.mxu0 %v794
        %824 = vmatprep.subr.mxu0 0.0
        %825 = vmatpush1.msra.mxu0 %v795
        %826 = vmatprep.subr.mxu0 0.0
        %827 = vmatpush1.msra.mxu0 %v796
        %828 = vmatprep.subr.mxu0 0.0
        %829 = vmatpush1.msra.mxu0 %v797
        %830 = vmatprep.subr.mxu0 0.0
        %831 = vmatpush1.msra.mxu0 %v798
        %832 = vmatprep.subr.mxu0 0.0
        %833 = vmatpush1.msra.mxu0 0.0
        %834 = vmatprep.subr.mxu0 0.0
        %835 = vmatpush1.msra.mxu0 0.0
        %836 = vmatprep.subr.mxu0 0.0
        %837 = vmatpush1.msra.mxu0 0.0
        %838 = vmatprep.subr.mxu0 0.0
        %839 = vmatpush1.msra.mxu0 0.0
        %840 = vmatprep.subr.mxu0 0.0
        %841 = vmatpush1.msra.mxu0 0.0
        %842 = vmatprep.subr.mxu0 0.0
        %843 = vmatpush1.msra.mxu0 0.0
        %844 = vmatprep.subr.mxu0 0.0
        %845 = vmatpush1.msra.mxu0 0.0
        %846 = vmatprep.subr.mxu0 0.0
        %847 = vmatpush1.msra.mxu0 0.0
        %848 = vmatprep.subr.mxu0 0.0
        %849 = vmatpush1.msra.mxu0 0.0
        %850 = vmatprep.subr.mxu0 0.0
        %851 = vmatpush1.msra.mxu0 0.0
        %852 = vmatprep.subr.mxu0 0.0
        %853 = vmatpush1.msra.mxu0 0.0
        %854 = vmatprep.subr.mxu0 0.0
        %855 = vmatpush1.msra.mxu0 0.0
        %856 = vmatprep.subr.mxu0 0.0
        %857 = vmatpush1.msra.mxu0 0.0
        %858 = vmatprep.subr.mxu0 0.0
        %859 = vmatpush1.msra.mxu0 0.0
        %860 = vmatprep.subr.mxu0 0.0
        %861 = vmatpush1.msra.mxu0 0.0
        %862 = vmatprep.subr.mxu0 0.0
        %863 = vmatpush1.msra.mxu0 0.0
        %864 = vmatprep.subr.mxu0 0.0
        %865 = vmatpush1.msra.mxu0 0.0
        %866 = vmatprep.subr.mxu0 0.0
        %867 = vmatpush1.msra.mxu0 0.0
        %868 = vmatprep.subr.mxu0 0.0
        %869 = vmatpush1.msra.mxu0 0.0
        %870 = vmatprep.subr.mxu0 0.0
        %871 = vmatpush1.msra.mxu0 0.0
        %872 = vmatprep.subr.mxu0 0.0
        %873 = vmatpush1.msra.mxu0 0.0
        %874 = vmatprep.subr.mxu0 0.0
        %875 = vmatpush1.msra.mxu0 0.0
        %876 = vmatprep.subr.mxu0 0.0
        %877 = vmatpush1.msra.mxu0 0.0
        %878 = vmatprep.subr.mxu0 0.0
        %879 = vmatpush1.msra.mxu0 0.0
        %880 = vmatprep.subr.mxu0 0.0
        %881 = vmatpush1.msra.mxu0 0.0
        %882 = vmatprep.subr.mxu0 0.0
        %883 = vmatpush1.msra.mxu0 0.0
        %884 = vmatprep.mubr.f32.mxu0 0.0
        %885 = vmatmul.mubr.f32.gmra.mrb[0].mxu0 %v815
        %v886 = vpop.f32.mrb[0].mxu0
        %v887 = vadd.f32 %v806, %v886
        %v888 = vpop.f32.mrb[0].mxu0
        %889 = vmatprep.mubr.f32.mxu0 0.0
        %890 = vmatmul.mubr.f32.gmra.mrb[0].mxu0 %v818
        %v891 = vpop.f32.mrb[0].mxu0
        %v892 = vadd.f32 %v811, %v891
        %v893 = vpop.f32.mrb[0].mxu0
        %894 = vdwg.mxu0
        %v895 = vmax.f32 %v887, 0.0
        %v896 = vmax.f32 %v892, 0.0
        %897 = vst [vmem:[%s338] sm:$0xff] %v895
        %898 = vst [vmem:[%s338 + $0x8] sm:$0xff] %v896
        %s899 = sand.u32 %s181, 1
        %s900 = scalar_lea.sflag [#allocation4], %s899
        %s901 = sand.u32 %s181, 1
        %s902 = smul.addr %s901, 16
        %s903 = scalar_lea.vmem [#allocation3], %s902
        // Predicated region
        $region87: #{tpu_custom_call.1} parent=81 // pred_check
          %p904 = pneg %p191
        $region88: #{tpu_custom_call.1} parent=81 // pred_check_branch
          %906 = sbr.rel (%p904) target = $region90
        $region89: #{tpu_custom_call.1} parent=81 // pred_region
          %s908 = ssub.s32 256, 256
          %909 = vsyncadd %s900, %s908
          %s910 = smul.addr %s21, 128
          %s911 = scalar_lea.hbm %s7, %s910
          %s912 = sshll.u32 %s903, 4
          %s913 = int_to_ptr.vmem [resolvable:$true] %s912
          %918 = dma.vmem_to_hbm [thread:$0]  %s913, 256, %s911, %s900, 128, 256, 8
        $region90: #{tpu_custom_call.1} parent=81 // pred_fallthru
          _
      $region82: #{tpu_custom_call.1} parent=5 // pred_fallthru
        _
      %p919 = scmp.le.s32.totalorder 2, %s16
      // Predicated region
      $region91: #{tpu_custom_call.1} parent=5 // pred_check
        %p920 = pneg %p919
      $region92: #{tpu_custom_call.1} parent=5 // pred_check_branch
        %922 = sbr.rel (%p920) target = $region94
      $region93: #{tpu_custom_call.1} parent=5 // pred_region
        %s923 = ssub.s32 %s16, 2
        // Predicated region
        $region95: #{tpu_custom_call.1} parent=93 // pred_check
          %p924 = pneg %p197
        $region96: #{tpu_custom_call.1} parent=93 // pred_check_branch
          %926 = sbr.rel (%p924) target = $region98
        $region97: #{tpu_custom_call.1} parent=93 // pred_region
          %s927 = sand.u32 %s182, 1
          %s928 = scalar_lea.sflag [#allocation4], %s927
          %s929 = sand.u32 %s182, 1
          %s930 = smul.addr %s929, 16
          %s931 = scalar_lea.vmem [#allocation3], %s930
          %932 = dma.done %s928, 256
        $region98: #{tpu_custom_call.1} parent=93 // pred_fallthru
          _
      $region94: #{tpu_custom_call.1} parent=5 // pred_fallthru
        _
    $region6: #{tpu_custom_call.1} parent=1 // loop_footer
      %s20 = sadd.s32 1, %s16
    $region7: #{tpu_custom_call.1} parent=1 // loop_footer_branch
      %15 = sbr.rel target = $region3
    $region8: #{tpu_custom_call.1} parent=1 // loop_exit
      _
    %933 = vsyncpa [#allocation4], 1
    %s934 = scalar_lea.sflag [#allocation4], 1
    %935 = vsyncpa %s934, 1

</llo_original>
